<compile_context>
chip_gen: v6e
topology: v6e:2x2x1
jax: 0.10.0
libtpu: 0.0.40
codegen_flags: <defaults>
</compile_context>

<pallas_src>
import functools

import jax
import jax.numpy as jnp
from jax.experimental import pallas as pl
from jax.experimental.pallas import tpu as pltpu

_LANES = 128
_SUBLANES = 8
_TARGET_BLOCK_BYTES = 2 * 1024 * 1024   # per input pipeline buffer (f32/128-lane => 4096 rows)
_SPLIT_MIN_ROWS = 512                   # 2-way split a single-tile problem only if rows >= 2*this


def _round_up(x: int, m: int) -> int:
    return ((x + m - 1) // m) * m


def _choose_tile_rows(rows: int, bytes_per_row: int, max_tile_rows=None) -> int:
    """Row-tile size: a multiple of 8 unless it spans all rows; ~2 MiB per buffer."""
    cap = max(_SUBLANES,
              (_TARGET_BLOCK_BYTES // max(1, bytes_per_row)) // _SUBLANES * _SUBLANES)
    if max_tile_rows is not None:
        cap = max(_SUBLANES, min(cap, (max_tile_rows // _SUBLANES) * _SUBLANES))
    if rows <= cap:
        if rows >= 2 * _SPLIT_MIN_ROWS:
            # Big enough to matter: split in two so a "parallel" grid keeps both
            # v7x TensorCores busy (costs one extra ~0.35 us step elsewhere).
            return _round_up((rows + 1) // 2, _SUBLANES)
        return rows             # single full-extent block (any row count is legal)
    return cap


def _kl_partial_kernel(mu_ref, lv_ref, out_ref, *, tile_rows, valid_rows, needs_mask):
    """One (tile_rows, D) tile -> (1, 8, 128) f32 block with the partial sum at [0,0,0]."""
    mu = mu_ref[...].astype(jnp.float32)
    lv = lv_ref[...].astype(jnp.float32)
    term = 1.0 + lv - mu * mu - jnp.exp(lv)          # VPU + EUP, f32
    if needs_mask:
        # Ragged last tile: mask rows past the valid extent BEFORE reducing.
        row_ids = (pl.program_id(0) * tile_rows
                   + jax.lax.broadcasted_iota(jnp.int32, term.shape, 0))
        term = jnp.where(row_ids < valid_rows, term, 0.0)
    s = jnp.sum(term)                                # one small reduce per MiB-scale tile
    r = jax.lax.broadcasted_iota(jnp.int32, (_SUBLANES, _LANES), 0)
    c = jax.lax.broadcasted_iota(jnp.int32, (_SUBLANES, _LANES), 1)
    out_ref[...] = jnp.where((r == 0) & (c == 0), s, 0.0)[None]


def kl_divergence_loss(mu: jax.Array, logvar: jax.Array, beta: float = 1.0,
                       *, max_tile_rows=None) -> jax.Array:
    """Pallas implementation of KLDivergenceLoss.forward. Returns a scalar f32."""
    assert mu.shape == logvar.shape and mu.ndim == 2, "expected (B, D) inputs"
    B, D = mu.shape

    bytes_per_row = _round_up(D, _LANES) * jnp.dtype(mu.dtype).itemsize
    tile_rows = _choose_tile_rows(B, bytes_per_row, max_tile_rows)
    num_tiles = pl.cdiv(B, tile_rows)
    needs_mask = (num_tiles * tile_rows) != B

    kernel = functools.partial(_kl_partial_kernel, tile_rows=tile_rows,
                               valid_rows=B, needs_mask=needs_mask)

    partials = pl.pallas_call(
        kernel,
        out_shape=jax.ShapeDtypeStruct((num_tiles, _SUBLANES, _LANES), jnp.float32),
        grid_spec=pltpu.PrefetchScalarGridSpec(
            num_scalar_prefetch=0,
            grid=(num_tiles,),
            in_specs=[
                pl.BlockSpec((tile_rows, D), lambda i: (i, 0)),
                pl.BlockSpec((tile_rows, D), lambda i: (i, 0)),
            ],
            out_specs=pl.BlockSpec((1, _SUBLANES, _LANES), lambda i: (i, 0, 0)),
        ),
        compiler_params=pltpu.CompilerParams(
            # Independent tiles -> "parallel" lets v7x shard them over both TCs.
            dimension_semantics=("parallel",),
        ),
    )(mu, logvar)

    # Folded scalar factor applied once; the final reduce over num_tiles*1024
    # f32 partials (zeros except one element per tile) is cheap XLA work.
    scale = jnp.float32(-0.5 * beta / B)
    return scale * jnp.sum(partials)


def _reference(mu, logvar, beta):
    mu = mu.astype(jnp.float32)
    logvar = logvar.astype(jnp.float32)
    kl = -0.5 * jnp.sum(1.0 + logvar - mu ** 2 - jnp.exp(logvar), axis=1)
    return beta * jnp.mean(kl)


if __name__ == "__main__":
    key = jax.random.PRNGKey(0)
    k = jax.random.split(key, 6)

    # 1) canonical small VAE-latent shape: single full-extent tile, no mask.
    mu1 = jax.random.normal(k[0], (8, 32), dtype=jnp.float32)
    lv1 = 0.1 * jax.random.normal(k[1], (8, 32), dtype=jnp.float32)
    out1 = kl_divergence_loss(mu1, lv1, beta=1.0)
    jax.block_until_ready(out1)
    ref1 = _reference(mu1, lv1, 1.0)
    assert jnp.allclose(out1, ref1, rtol=1e-4, atol=1e-5), (out1, ref1)

    # 2) non-128 latent dim + forced small tiles: multi-tile grid, ragged last
    #    tile exercised via the in-kernel broadcasted_iota row mask.
    mu2 = jax.random.normal(k[2], (60, 100), dtype=jnp.float32)
    lv2 = 0.1 * jax.random.normal(k[3], (60, 100), dtype=jnp.float32)
    out2 = kl_divergence_loss(mu2, lv2, beta=0.5, max_tile_rows=16)
    jax.block_until_ready(out2)
    ref2 = _reference(mu2, lv2, 0.5)
    assert jnp.allclose(out2, ref2, rtol=1e-4, atol=1e-5), (out2, ref2)

    # 3) bf16 inputs: in-kernel upcast-to-f32 path.
    mu3 = jax.random.normal(k[4], (16, 64), dtype=jnp.bfloat16)
    lv3 = (0.1 * jax.random.normal(k[5], (16, 64))).astype(jnp.bfloat16)
    out3 = kl_divergence_loss(mu3, lv3, beta=2.0)
    jax.block_until_ready(out3)
    ref3 = _reference(mu3, lv3, 2.0)
    assert jnp.allclose(out3, ref3, rtol=2e-3, atol=1e-4), (out3, ref3)

    print("KERNEL_OK")
</pallas_src>

<mosaic_0001>
module attributes {stable_mosaic.version = 11 : i64} {
  func.func @_kl_partial_kernel(%arg0: i32, %arg1: memref<8x32xf32, #tpu.memory_space<vmem>>, %arg2: memref<8x32xf32, #tpu.memory_space<vmem>>, %arg3: memref<1x8x128xf32, #tpu.memory_space<vmem>>) attributes {dimension_semantics = [#tpu.dimension_semantics<parallel>], iteration_bounds = array<i64: 1>, scalar_prefetch = 0 : i64, scratch_operands = 0 : i64, tpu.core_type = #tpu.core_type<tc>, window_params = [{transform_indices = @transform_0, window_bounds = array<i64: 8, 32>}, {transform_indices = @transform_1, window_bounds = array<i64: 8, 32>}, {transform_indices = @transform_2, window_bounds = array<i64: 1, 8, 128>}]} {
    %c0 = arith.constant 0 : index
    %c0_0 = arith.constant 0 : index
    %0 = vector.load %arg1[%c0, %c0_0] : memref<8x32xf32, #tpu.memory_space<vmem>>, vector<8x32xf32>
    %c0_1 = arith.constant 0 : index
    %c0_2 = arith.constant 0 : index
    %1 = vector.load %arg2[%c0_1, %c0_2] : memref<8x32xf32, #tpu.memory_space<vmem>>, vector<8x32xf32>
    %cst = arith.constant 1.000000e+00 : f32
    %2 = vector.broadcast %cst : f32 to vector<8x32xf32>
    %3 = arith.addf %2, %1 : vector<8x32xf32>
    %4 = arith.mulf %0, %0 : vector<8x32xf32>
    %5 = arith.subf %3, %4 : vector<8x32xf32>
    %6 = math.exp %1 : vector<8x32xf32>
    %7 = arith.subf %5, %6 : vector<8x32xf32>
    %8 = vector.shape_cast %7 : vector<8x32xf32> to vector<1x8x32xf32>
    %cst_3 = arith.constant dense<0.000000e+00> : vector<1xf32>
    %9 = vector.multi_reduction <add>, %8, %cst_3 [1, 2] : vector<1x8x32xf32> to vector<1xf32>
    %10 = vector.shape_cast %9 : vector<1xf32> to vector<1x1x1xf32>
    %11 = vector.extract %10[0, 0, 0] : f32 from vector<1x1x1xf32>
    %12 = tpu.iota {dimensions = array<i32: 0>} : vector<8x128xi32>
    %13 = tpu.iota {dimensions = array<i32: 1>} : vector<8x128xi32>
    %c0_i32 = arith.constant 0 : i32
    %14 = vector.broadcast %c0_i32 : i32 to vector<8x128xi32>
    %15 = arith.cmpi eq, %12, %14 : vector<8x128xi32>
    %c0_i32_4 = arith.constant 0 : i32
    %16 = vector.broadcast %c0_i32_4 : i32 to vector<8x128xi32>
    %17 = arith.cmpi eq, %13, %16 : vector<8x128xi32>
    %18 = arith.andi %15, %17 : vector<8x128xi1>
    %cst_5 = arith.constant 0.000000e+00 : f32
    %19 = vector.broadcast %11 : f32 to vector<8x128xf32>
    %20 = vector.broadcast %cst_5 : f32 to vector<8x128xf32>
    %21 = arith.select %18, %19, %20 : vector<8x128xi1>, vector<8x128xf32>
    %22 = vector.shape_cast %21 : vector<8x128xf32> to vector<1x8x128xf32>
    %c0_6 = arith.constant 0 : index
    %c0_7 = arith.constant 0 : index
    %c0_8 = arith.constant 0 : index
    %23 = vector.load %arg3[%c0_6, %c0_7, %c0_8] : memref<1x8x128xf32, #tpu.memory_space<vmem>>, vector<1x8x128xf32>
    tpu.vector_store %arg3[%c0_6, %c0_7, %c0_8], %22 {strides = array<i32>} : memref<1x8x128xf32, #tpu.memory_space<vmem>>, vector<1x8x128xf32>,
    return
  }
  func.func @transform_0(%arg0: i32) -> (i32, i32) {
    %c0_i32 = arith.constant 0 : i32
    %c0_i32_0 = arith.constant 0 : i32
    return %arg0, %c0_i32 : i32, i32
  }
  func.func @transform_1(%arg0: i32) -> (i32, i32) {
    %c0_i32 = arith.constant 0 : i32
    %c0_i32_0 = arith.constant 0 : i32
    return %arg0, %c0_i32 : i32, i32
  }
  func.func @transform_2(%arg0: i32) -> (i32, i32, i32) {
    %c0_i32 = arith.constant 0 : i32
    %c0_i32_0 = arith.constant 0 : i32
    %c0_i32_1 = arith.constant 0 : i32
    return %arg0, %c0_i32, %c0_i32_0 : i32, i32, i32
  }
}

</mosaic_0001>

<llo_original>
// kernel: tpu_custom_call.1
$region0: #{tpu_custom_call.1}
  #allocation0 [shape = 'u32[]', space=smem, size = 0x4, offset = 0x4, fixed_abs, tag = 'smem constant byte address 0x4 - core index']
  #allocation1 [shape = 'u32[144,128]{1,0:T(1,128)}', space=vmem, size = 0x12000, scoped, tag = 'internal scratch']
  %s0 = inlined_call_operand.hbm [shape: f32[8,32], index: 0, kind: input, shape index: {}]
  %s1 = inlined_call_operand.hbm [shape: f32[8,32], index: 1, kind: input, shape index: {}]
  %s2 = inlined_call_operand.hbm [shape: f32[1,8,128], index: 2, kind: output, shape index: {}]
  %s3 = sld [smem:[#allocation0]]
  $region26: #{tpu_custom_call.1} parent=0
    _
  %s5 = ssub.s32 1, %s3
  %s6 = scalar_select 0, %s5, %s3
  $region1: #{tpu_custom_call.1} parent=0
    #allocation2 [shape = 'u8[4096]{0}', space=vmem, size = 0x1000, scoped, tag = 'input window, operand 0, single buffered']
    #allocation3 [shape = 's32[1]{0}', space=sflag, size = 0x4, scoped, tag = 'scoped memory for tpu_custom_call.1']
    #allocation4 [shape = 's32[1]{0}', space=sflag, size = 0x4, scoped, tag = 'scoped memory for tpu_custom_call.1']
    #allocation5 [shape = 'u8[4096]{0}', space=vmem, size = 0x1000, scoped, tag = 'input window, operand 1, single buffered']
    #allocation6 [shape = 's32[1]{0}', space=sflag, size = 0x4, scoped, tag = 'scoped memory for tpu_custom_call.1']
    #allocation7 [shape = 'u8[4096]{0}', space=vmem, size = 0x1000, scoped, tag = 'output window, operand 0, single buffered']
    %7 = vsyncpa [#allocation3], 0
    %8 = vsyncpa [#allocation6], 0
    %9 = vsyncpa [#allocation4], 0
    // Predicated region
    $region2: #{tpu_custom_call.1} parent=1 // pred_check
      _
    $region3: #{tpu_custom_call.1} parent=1 // pred_check_branch
      %11 = sbr.rel (0) target = $region5
    $region4: #{tpu_custom_call.1} parent=1 // pred_region
      %s13 = ssub.s32 128, 128
      %14 = vsyncadd [#allocation3], %s13
      %s16 = sshll.u32 [#allocation2], 4
      %s17 = int_to_ptr.vmem [resolvable:$true] %s16
      %19 = dma.hbm_to_vmem [thread:$0]  %s0, 128, %s17, [#allocation3]
    $region5: #{tpu_custom_call.1} parent=1 // pred_fallthru
      _
    // Predicated region
    $region6: #{tpu_custom_call.1} parent=1 // pred_check
      _
    $region7: #{tpu_custom_call.1} parent=1 // pred_check_branch
      %21 = sbr.rel (0) target = $region9
    $region8: #{tpu_custom_call.1} parent=1 // pred_region
      %s23 = ssub.s32 128, 128
      %24 = vsyncadd [#allocation6], %s23
      %s26 = sshll.u32 [#allocation5], 4
      %s27 = int_to_ptr.vmem [resolvable:$true] %s26
      %29 = dma.hbm_to_vmem [thread:$0]  %s1, 128, %s27, [#allocation6]
    $region9: #{tpu_custom_call.1} parent=1 // pred_fallthru
      _
    // Predicated region
    $region10: #{tpu_custom_call.1} parent=1 // pred_check
      _
    $region11: #{tpu_custom_call.1} parent=1 // pred_check_branch
      %31 = sbr.rel (0) target = $region13
    $region12: #{tpu_custom_call.1} parent=1 // pred_region
      %32 = dma.done [#allocation3], 128
    $region13: #{tpu_custom_call.1} parent=1 // pred_fallthru
      _
    // Predicated region
    $region14: #{tpu_custom_call.1} parent=1 // pred_check
      _
    $region15: #{tpu_custom_call.1} parent=1 // pred_check_branch
      %34 = sbr.rel (0) target = $region17
    $region16: #{tpu_custom_call.1} parent=1 // pred_region
      %35 = dma.done [#allocation6], 128
    $region17: #{tpu_custom_call.1} parent=1 // pred_fallthru
      _
    %v36 = vld [vmem:[#allocation2] sm:$0xff]
    %v37 = vld [vmem:[#allocation5] sm:$0xff]
    %v38 = vadd.f32 %v37, 1.0
    %v39 = vmul.f32 %v36, %v36
    %v40 = vsub.f32 %v38, %v39
    %v41 = vmul.f32 %v37, 1.442695
    %v42 = vpow.pop %v41
    %v43 = vsub.f32 %v40, %v42
    %vm44 = vcmask 261120
    %v45 = vsel %vm44, %v43, 0.0
    %46 = vadd.xlane.f32.xlu0 %v45
    %v47 = vpop.xlane.xlu0 %46
    %v48 = vrot.slane %v47, 4
    %v49 = vadd.f32 %v47, %v48
    %v50 = vrot.slane %v49, 2
    %v51 = vadd.f32 %v49, %v50
    %v52 = vrot.slane %v51, 1
    %v53 = vadd.f32 %v51, %v52
    %s54 = vtos %v53
    %v55 = vlaneseq
    %v56 = vshrl.u32 %v55, 7
    %v57 = vlaneseq
    %v58 = vand.u32 %v57, 127
    %vm59 = vcmp.eq.s32.totalorder %v56, 0
    %vm60 = vcmp.eq.s32.totalorder %v58, 0
    %vm61 = vmand %vm59, %vm60
    %v62 = vstv %s54
    %v63 = vsel %vm61, %v62, 0.0
    %64 = vst [vmem:[#allocation7] sm:$0xff] %v63
    // Predicated region
    $region18: #{tpu_custom_call.1} parent=1 // pred_check
      _
    $region19: #{tpu_custom_call.1} parent=1 // pred_check_branch
      %66 = sbr.rel (0) target = $region21
    $region20: #{tpu_custom_call.1} parent=1 // pred_region
      %s68 = ssub.s32 128, 128
      %69 = vsyncadd [#allocation4], %s68
      %s71 = sshll.u32 [#allocation7], 4
      %s72 = int_to_ptr.vmem [resolvable:$true] %s71
      %74 = dma.vmem_to_hbm [thread:$0]  %s72, 128, %s2, [#allocation4]
    $region21: #{tpu_custom_call.1} parent=1 // pred_fallthru
      _
    // Predicated region
    $region22: #{tpu_custom_call.1} parent=1 // pred_check
      _
    $region23: #{tpu_custom_call.1} parent=1 // pred_check_branch
      %76 = sbr.rel (0) target = $region25
    $region24: #{tpu_custom_call.1} parent=1 // pred_region
      %77 = dma.done [#allocation4], 128
    $region25: #{tpu_custom_call.1} parent=1 // pred_fallthru
      _
    %78 = vsyncpa [#allocation3], 1
    %79 = vsyncpa [#allocation6], 1
    %80 = vsyncpa [#allocation4], 1

</llo_original>
